<compile_context>
chip_gen: v7x
topology: tpu7x:2x2x1
jax: 0.10.0
libtpu: 0.0.40
codegen_flags: <defaults>
</compile_context>

<pallas_src>
import jax
import jax.numpy as jnp
from jax.experimental import pallas as pl
from jax.experimental.pallas import tpu as pltpu

_LANES = 128          # TPU lane width: pad num_labels to this for lane-dense stores
_NEG_BIG = -1.0e30    # finite "-inf" for padded label lanes -> softmax mass ~0
                      # (representable in bf16; would overflow in float16)


def _round_up(n, m):
    return ((n + m - 1) // m) * m


def _classifier_kernel(x_ref, wt_ref, b_ref, logits_ref, probs_ref):
    """Linear (x @ W^T + b) + numerically-stable softmax, lane-dense labels.

    x_ref:      (Bt, E)   input embeddings (dropout == identity in eval mode)
    wt_ref:     (E, LP)   pre-transposed, zero-padded weight (matmul dtype)
    b_ref:      (1, LP)   f32 bias; padded lanes hold a large negative value
    logits_ref: (Bt, LP)  (bf16 by default -> halved writeback)
    probs_ref:  (Bt, LP)
    """
    wt = wt_ref[...]
    x = x_ref[...]
    if x.dtype != wt.dtype:
        # Cast only when needed; if the producer already emits the matmul
        # dtype (e.g. bf16 activations) this is a no-op.
        x = x.astype(wt.dtype)

    # MXU matmul, f32 accumulation; bias add + softmax math all in f32.
    logits = jnp.dot(x, wt, preferred_element_type=jnp.float32) + b_ref[...]
    logits_ref[...] = logits.astype(logits_ref.dtype)

    m = jnp.max(logits, axis=-1, keepdims=True)
    e = jnp.exp(logits - m)
    denom = jnp.sum(e, axis=-1, keepdims=True)
    # Exact reciprocal: still a single EUP op (slot has slack), no ~1e-3
    # row-sum error.
    probs_ref[...] = (e * pl.reciprocal(denom, approx=False)).astype(probs_ref.dtype)


class PallasClassifier:
    """Eval-mode Pallas TPU equivalent of the PyTorch `Classifier` module.

    Weight prep (transpose + lane-pad + dtype cast) happens ONCE here, not on
    every forward call.
    """

    def __init__(self, weight, bias, *, dropout=0.0,
                 matmul_dtype=jnp.bfloat16, out_dtype=jnp.bfloat16,
                 block_b=512, vmem_limit_bytes=None):
        # weight: (L, E) PyTorch nn.Linear layout;  bias: (L,)
        self.num_labels, self.embedding_dim = weight.shape
        self.dropout = dropout            # identity at inference time
        self.matmul_dtype = matmul_dtype
        self.out_dtype = out_dtype
        self.block_b = block_b
        self.vmem_limit_bytes = vmem_limit_bytes

        L, E = self.num_labels, self.embedding_dim
        self.lp = _round_up(max(L, _LANES), _LANES)

        # One-time prep: transpose + lane-pad the weight (stored in the matmul
        # dtype so its HBM read is halved for bf16); pad the bias with a big
        # negative value so padded label lanes carry ~0 softmax mass.
        self.wt = (jnp.zeros((E, self.lp), matmul_dtype)
                   .at[:, :L].set(jnp.asarray(weight).T.astype(matmul_dtype)))
        self.b2 = (jnp.full((1, self.lp), _NEG_BIG, jnp.float32)
                   .at[0, :L].set(jnp.asarray(bias).astype(jnp.float32)))

    def __call__(self, x):
        """x: (B, E) embeddings (f32 or bf16).  Returns (logits, probs), each (B, L)."""
        B, E = x.shape
        assert E == self.embedding_dim
        L, LP = self.num_labels, self.lp
        out_shapes = (jax.ShapeDtypeStruct((B, LP), self.out_dtype),
                      jax.ShapeDtypeStruct((B, LP), self.out_dtype))
        compiler_params = pltpu.CompilerParams(
            dimension_semantics=("parallel",),
            vmem_limit_bytes=self.vmem_limit_bytes,
        )

        if self.block_b is None or B <= self.block_b:
            # Small batch: single invocation, whole arrays resident in VMEM,
            # no grid / pipelining machinery.
            vmem = pl.BlockSpec(memory_space=pltpu.MemorySpace.VMEM)
            logits_p, probs_p = pl.pallas_call(
                _classifier_kernel,
                out_shape=out_shapes,
                in_specs=[vmem, vmem, vmem],
                out_specs=(vmem, vmem),
            )(x, self.wt, self.b2)
        else:
            # Batch-tiled "parallel" grid; weight/bias stay whole-array
            # resident across the grid.  No wrapper-side padding of x: the
            # partial last block (if any) is masked by Pallas; its OOB rows
            # may hold garbage/NaN in VMEM but softmax is row-wise and those
            # rows are never written back.  Do NOT add batch reductions
            # inside this kernel without revisiting that.
            bb = self.block_b
            nb = pl.cdiv(B, bb)
            out_spec = pl.BlockSpec((bb, LP), lambda i: (i, 0))
            logits_p, probs_p = pl.pallas_call(
                _classifier_kernel,
                out_shape=out_shapes,
                grid=(nb,),
                in_specs=[
                    pl.BlockSpec((bb, E), lambda i: (i, 0)),
                    pl.BlockSpec((E, LP), lambda i: (0, 0)),
                    pl.BlockSpec((1, LP), lambda i: (0, 0)),
                ],
                out_specs=(out_spec, out_spec),
                compiler_params=compiler_params,
            )(x, self.wt, self.b2)

        # Slice away the lane padding (tiny XLA copy: (B, L) only).
        return logits_p[:, :L], probs_p[:, :L]


if __name__ == "__main__":
    # Small shapes consistent with the module: batch=8, embedding_dim=32, labels=4.
    B, E, L = 8, 32, 4
    dropout_p = 0.1  # nn.Dropout is identity in eval mode

    key = jax.random.PRNGKey(0)
    kx, kw, kb, kx2 = jax.random.split(key, 4)

    x = jax.random.normal(kx, (B, E), dtype=jnp.float32)
    # Deterministic "nn.Linear"-style init: U(-1/sqrt(E), 1/sqrt(E))
    bound = 1.0 / (E ** 0.5)
    weight = jax.random.uniform(kw, (L, E), dtype=jnp.float32, minval=-bound, maxval=bound)
    bias = jax.random.uniform(kb, (L,), dtype=jnp.float32, minval=-bound, maxval=bound)

    ref_logits = x @ weight.T + bias
    ref_probs = jax.nn.softmax(ref_logits, axis=-1)

    # --- Path 1: exact-precision path (f32 matmul, f32 outputs, no grid) -------
    clf_f32 = PallasClassifier(weight, bias, dropout=dropout_p,
                               matmul_dtype=jnp.float32, out_dtype=jnp.float32)
    logits, probs = clf_f32(x)
    jax.block_until_ready((logits, probs))
    assert logits.shape == (B, L) and probs.shape == (B, L)
    assert jnp.allclose(logits, ref_logits, atol=1e-5, rtol=1e-5)
    assert jnp.allclose(probs, ref_probs, atol=1e-4, rtol=1e-4)
    assert jnp.allclose(jnp.sum(probs, axis=-1), 1.0, atol=1e-4)

    # --- Path 2: default perf path (bf16 MXU operands, bf16 outputs) -----------
    clf = PallasClassifier(weight, bias, dropout=dropout_p)   # bf16 defaults
    logits_bf, probs_bf = clf(x)
    jax.block_until_ready((logits_bf, probs_bf))
    assert logits_bf.dtype == jnp.bfloat16 and probs_bf.dtype == jnp.bfloat16
    assert jnp.allclose(logits_bf.astype(jnp.float32), ref_logits, atol=3e-2, rtol=3e-2)
    assert jnp.allclose(probs_bf.astype(jnp.float32), ref_probs, atol=2e-2, rtol=2e-2)
    assert jnp.allclose(jnp.sum(probs_bf.astype(jnp.float32), axis=-1), 1.0, atol=2e-2)

    # --- Path 3: batch-tiled "parallel" grid with a partial last block ---------
    # B2=30 with block_b=8 -> grid of 4 blocks, last block partial (no jnp.pad).
    B2 = 30
    x2 = jax.random.normal(kx2, (B2, E), dtype=jnp.float32)
    clf_tiled = PallasClassifier(weight, bias, dropout=dropout_p, block_b=8)
    logits2, probs2 = clf_tiled(x2)
    jax.block_until_ready((logits2, probs2))
    ref_logits2 = x2 @ weight.T + bias
    ref_probs2 = jax.nn.softmax(ref_logits2, axis=-1)
    assert logits2.shape == (B2, L) and probs2.shape == (B2, L)
    assert jnp.allclose(logits2.astype(jnp.float32), ref_logits2, atol=3e-2, rtol=3e-2)
    assert jnp.allclose(probs2.astype(jnp.float32), ref_probs2, atol=2e-2, rtol=2e-2)
    assert jnp.allclose(jnp.sum(probs2.astype(jnp.float32), axis=-1), 1.0, atol=2e-2)

    # --- Path 4: bf16 activations straight from the producer (no in-kernel cast)
    logits3, probs3 = clf_tiled(x2.astype(jnp.bfloat16))
    jax.block_until_ready((logits3, probs3))
    assert jnp.allclose(logits3.astype(jnp.float32), ref_logits2, atol=5e-2, rtol=5e-2)
    assert jnp.allclose(jnp.sum(probs3.astype(jnp.float32), axis=-1), 1.0, atol=2e-2)

    print("KERNEL_OK")
</pallas_src>

<mosaic_0001>
module attributes {stable_mosaic.version = 11 : i64} {
  func.func @_classifier_kernel(%arg0: memref<8x32xf32, #tpu.memory_space<vmem>>, %arg1: memref<32x128xf32, #tpu.memory_space<vmem>>, %arg2: memref<1x128xf32, #tpu.memory_space<vmem>>, %arg3: memref<8x128xf32, #tpu.memory_space<vmem>>, %arg4: memref<8x128xf32, #tpu.memory_space<vmem>>) attributes {dimension_semantics = [], scalar_prefetch = 0 : i64, scratch_operands = 0 : i64, tpu.core_type = #tpu.core_type<tc>} {
    %c0 = arith.constant 0 : index
    %c0_0 = arith.constant 0 : index
    %0 = vector.load %arg1[%c0, %c0_0] : memref<32x128xf32, #tpu.memory_space<vmem>>, vector<32x128xf32>
    %c0_1 = arith.constant 0 : index
    %c0_2 = arith.constant 0 : index
    %1 = vector.load %arg0[%c0_1, %c0_2] : memref<8x32xf32, #tpu.memory_space<vmem>>, vector<8x32xf32>
    %cst = arith.constant dense<0.000000e+00> : vector<8x128xf32>
    %2 = tpu.matmul %1, %0, %cst {dimension_numbers = #tpu.dot_dimension_numbers<[1], [0], [0], [1], [0, 0, 1, 1], [], []>} : vector<8x32xf32>, vector<32x128xf32>, vector<8x128xf32> -> vector<8x128xf32>
    %c0_3 = arith.constant 0 : index
    %c0_4 = arith.constant 0 : index
    %3 = vector.load %arg2[%c0_3, %c0_4] : memref<1x128xf32, #tpu.memory_space<vmem>>, vector<1x128xf32>
    %4 = vector.broadcast %3 : vector<1x128xf32> to vector<8x128xf32>
    %5 = arith.addf %2, %4 : vector<8x128xf32>
    %c0_5 = arith.constant 0 : index
    %c0_6 = arith.constant 0 : index
    %6 = vector.load %arg3[%c0_5, %c0_6] : memref<8x128xf32, #tpu.memory_space<vmem>>, vector<8x128xf32>
    tpu.vector_store %arg3[%c0_5, %c0_6], %5 {strides = array<i32>} : memref<8x128xf32, #tpu.memory_space<vmem>>, vector<8x128xf32>,
    %cst_7 = arith.constant dense<0xFF800000> : vector<8xf32>
    %7 = vector.multi_reduction <maximumf>, %5, %cst_7 [1] : vector<8x128xf32> to vector<8xf32>
    %8 = vector.shape_cast %7 : vector<8xf32> to vector<8x1xf32>
    %9 = vector.broadcast %8 : vector<8x1xf32> to vector<8x128xf32>
    %10 = arith.subf %5, %9 : vector<8x128xf32>
    %11 = math.exp %10 : vector<8x128xf32>
    %cst_8 = arith.constant dense<0.000000e+00> : vector<8xf32>
    %12 = vector.multi_reduction <add>, %11, %cst_8 [1] : vector<8x128xf32> to vector<8xf32>
    %13 = vector.shape_cast %12 : vector<8xf32> to vector<8x1xf32>
    %14 = tpu.reciprocal %13 : vector<8x1xf32> -> vector<8x1xf32>
    %15 = vector.broadcast %14 : vector<8x1xf32> to vector<8x128xf32>
    %16 = arith.mulf %11, %15 : vector<8x128xf32>
    %c0_9 = arith.constant 0 : index
    %c0_10 = arith.constant 0 : index
    %17 = vector.load %arg4[%c0_9, %c0_10] : memref<8x128xf32, #tpu.memory_space<vmem>>, vector<8x128xf32>
    tpu.vector_store %arg4[%c0_9, %c0_10], %16 {strides = array<i32>} : memref<8x128xf32, #tpu.memory_space<vmem>>, vector<8x128xf32>,
    return
  }
}

</mosaic_0001>

<llo_original>
// kernel: tpu_custom_call.1
$region0: #{tpu_custom_call.1}
  #allocation0 [shape = 'u32[]', space=smem, size = 0x4, offset = 0x4, fixed_abs, tag = 'smem constant byte address 0x4 - core index']
  #allocation1 [shape = 'u32[144,128]{1,0:T(1,128)}', space=vmem, size = 0x12000, scoped, tag = 'internal scratch']
  %s0 = inlined_call_operand.hbm [shape: f32[8,32], index: 0, kind: input, shape index: {}]
  %s1 = inlined_call_operand.hbm [shape: f32[32,128], index: 1, kind: input, shape index: {}]
  %s2 = inlined_call_operand.vmem [shape: f32[1,128], index: 2, kind: input, shape index: {}]
  %s3 = inlined_call_operand.hbm [shape: f32[8,128], index: 3, kind: output, shape index: {0}]
  %s4 = inlined_call_operand.hbm [shape: f32[8,128], index: 4, kind: output, shape index: {1}]
  %5 = xla_tuple %s3, %s4
  %s6 = sld [smem:[#allocation0]]
  $region38: #{tpu_custom_call.1} parent=0
    _
  %s8 = ssub.s32 1, %s6
  %s9 = scalar_select 0, %s8, %s6
  $region1: #{tpu_custom_call.1} parent=0
    #allocation2 [shape = 'u8[4096]{0}', space=vmem, size = 0x1000, scoped, tag = 'input window, operand 0, single buffered']
    #allocation3 [shape = 's32[1]{0}', space=sflag, size = 0x4, scoped, tag = 'scoped memory for tpu_custom_call.1']
    #allocation4 [shape = 's32[1]{0}', space=sflag, size = 0x4, scoped, tag = 'scoped memory for tpu_custom_call.1']
    #allocation5 [shape = 'u8[16384]{0}', space=vmem, size = 0x4000, scoped, tag = 'input window, operand 1, single buffered']
    #allocation6 [shape = 's32[1]{0}', space=sflag, size = 0x4, scoped, tag = 'scoped memory for tpu_custom_call.1']
    #allocation7 [shape = 'u8[4096]{0}', space=vmem, size = 0x1000, scoped, tag = 'output window, operand 0, single buffered']
    #allocation8 [shape = 'u8[4096]{0}', space=vmem, size = 0x1000, scoped, tag = 'output window, operand 1, single buffered']
    #allocation9 [shape = 's32[1]{0}', space=sflag, size = 0x4, scoped, tag = 'scoped memory for tpu_custom_call.1']
    %10 = vsyncpa [#allocation3], 0
    %11 = vsyncpa [#allocation6], 0
    %12 = vsyncpa [#allocation4], 0
    %13 = vsyncpa [#allocation9], 0
    // Predicated region
    $region2: #{tpu_custom_call.1} parent=1 // pred_check
      _
    $region3: #{tpu_custom_call.1} parent=1 // pred_check_branch
      %15 = sbr.rel (0) target = $region5
    $region4: #{tpu_custom_call.1} parent=1 // pred_region
      %s17 = ssub.s32 128, 128
      %18 = vsyncadd [#allocation3], %s17
      %s20 = sshll.u32 [#allocation2], 4
      %s21 = int_to_ptr.vmem [resolvable:$true] %s20
      %23 = dma.hbm_to_vmem [thread:$0]  %s0, 128, %s21, [#allocation3]
    $region5: #{tpu_custom_call.1} parent=1 // pred_fallthru
      _
    // Predicated region
    $region6: #{tpu_custom_call.1} parent=1 // pred_check
      _
    $region7: #{tpu_custom_call.1} parent=1 // pred_check_branch
      %25 = sbr.rel (0) target = $region9
    $region8: #{tpu_custom_call.1} parent=1 // pred_region
      %s27 = ssub.s32 512, 512
      %28 = vsyncadd [#allocation6], %s27
      %s29 = sshll.u32 [#allocation5], 4
      %s30 = int_to_ptr.vmem [resolvable:$true] %s29
      %35 = dma.hbm_to_vmem [thread:$0]  %s1, 512, %s30, [#allocation6], 128, 128, 8
    $region9: #{tpu_custom_call.1} parent=1 // pred_fallthru
      _
    // Predicated region
    $region10: #{tpu_custom_call.1} parent=1 // pred_check
      _
    $region11: #{tpu_custom_call.1} parent=1 // pred_check_branch
      %37 = sbr.rel (0) target = $region13
    $region12: #{tpu_custom_call.1} parent=1 // pred_region
      _
    $region13: #{tpu_custom_call.1} parent=1 // pred_fallthru
      _
    // Predicated region
    $region14: #{tpu_custom_call.1} parent=1 // pred_check
      _
    $region15: #{tpu_custom_call.1} parent=1 // pred_check_branch
      %39 = sbr.rel (0) target = $region17
    $region16: #{tpu_custom_call.1} parent=1 // pred_region
      %40 = dma.done [#allocation3], 128
    $region17: #{tpu_custom_call.1} parent=1 // pred_fallthru
      _
    // Predicated region
    $region18: #{tpu_custom_call.1} parent=1 // pred_check
      _
    $region19: #{tpu_custom_call.1} parent=1 // pred_check_branch
      %42 = sbr.rel (0) target = $region21
    $region20: #{tpu_custom_call.1} parent=1 // pred_region
      %43 = dma.done [#allocation6], 512
    $region21: #{tpu_custom_call.1} parent=1 // pred_fallthru
      _
    %v44 = vld [vmem:[#allocation5] sm:$0xff]
    %v45 = vld [vmem:[#allocation5 + $0x8] sm:$0xff]
    %v46 = vld [vmem:[#allocation5 + $0x10] sm:$0xff]
    %v47 = vld [vmem:[#allocation5 + $0x18] sm:$0xff]
    %v48 = vld [vmem:[#allocation2] sm:$0xff]
    %v49 = vld [vmem:[%s2] sm:$0x1]
    %v51 = vlaneseq
    %v52 = vshrl.u32 %v51, 7
    %v53 = vsub.s32 0, %v52
    %v54 = vrot.slane %v49, %v53
    %vm56 = vcmask 261120
    %v58 = vsel %vm56, %v48, 0
    %60 = vmatprep.subr.mxu0 0.0
    %61 = vmatpush1.msra.mxu0 %v44
    %62 = vmatprep.subr.mxu0 0.0
    %63 = vmatpush1.msra.mxu0 %v45
    %64 = vmatprep.subr.mxu0 0.0
    %65 = vmatpush1.msra.mxu0 %v46
    %66 = vmatprep.subr.mxu0 0.0
    %67 = vmatpush1.msra.mxu0 %v47
    %68 = vmatprep.subr.mxu0 0.0
    %69 = vmatpush1.msra.mxu0 0.0
    %70 = vmatprep.subr.mxu0 0.0
    %71 = vmatpush1.msra.mxu0 0.0
    %72 = vmatprep.subr.mxu0 0.0
    %73 = vmatpush1.msra.mxu0 0.0
    %74 = vmatprep.subr.mxu0 0.0
    %75 = vmatpush1.msra.mxu0 0.0
    %76 = vmatprep.subr.mxu0 0.0
    %77 = vmatpush1.msra.mxu0 0.0
    %78 = vmatprep.subr.mxu0 0.0
    %79 = vmatpush1.msra.mxu0 0.0
    %80 = vmatprep.subr.mxu0 0.0
    %81 = vmatpush1.msra.mxu0 0.0
    %82 = vmatprep.subr.mxu0 0.0
    %83 = vmatpush1.msra.mxu0 0.0
    %84 = vmatprep.subr.mxu0 0.0
    %85 = vmatpush1.msra.mxu0 0.0
    %86 = vmatprep.subr.mxu0 0.0
    %87 = vmatpush1.msra.mxu0 0.0
    %88 = vmatprep.subr.mxu0 0.0
    %89 = vmatpush1.msra.mxu0 0.0
    %90 = vmatprep.subr.mxu0 0.0
    %91 = vmatpush1.msra.mxu0 0.0
    %92 = vmatprep.subr.mxu0 0.0
    %93 = vmatpush1.msra.mxu0 0.0
    %94 = vmatprep.subr.mxu0 0.0
    %95 = vmatpush1.msra.mxu0 0.0
    %96 = vmatprep.subr.mxu0 0.0
    %97 = vmatpush1.msra.mxu0 0.0
    %98 = vmatprep.subr.mxu0 0.0
    %99 = vmatpush1.msra.mxu0 0.0
    %100 = vmatprep.subr.mxu0 0.0
    %101 = vmatpush1.msra.mxu0 0.0
    %102 = vmatprep.subr.mxu0 0.0
    %103 = vmatpush1.msra.mxu0 0.0
    %104 = vmatprep.subr.mxu0 0.0
    %105 = vmatpush1.msra.mxu0 0.0
    %106 = vmatprep.subr.mxu0 0.0
    %107 = vmatpush1.msra.mxu0 0.0
    %108 = vmatprep.subr.mxu0 0.0
    %109 = vmatpush1.msra.mxu0 0.0
    %110 = vmatprep.subr.mxu0 0.0
    %111 = vmatpush1.msra.mxu0 0.0
    %112 = vmatprep.subr.mxu0 0.0
    %113 = vmatpush1.msra.mxu0 0.0
    %114 = vmatprep.subr.mxu0 0.0
    %115 = vmatpush1.msra.mxu0 0.0
    %116 = vmatprep.subr.mxu0 0.0
    %117 = vmatpush1.msra.mxu0 0.0
    %118 = vmatprep.subr.mxu0 0.0
    %119 = vmatpush1.msra.mxu0 0.0
    %120 = vmatprep.subr.mxu0 0.0
    %121 = vmatpush1.msra.mxu0 0.0
    %122 = vmatprep.subr.mxu0 0.0
    %123 = vmatpush1.msra.mxu0 0.0
    %124 = vmatprep.mubr.f32.mxu0 0.0
    %125 = vmatmul.mubr.f32.gmra.mrb[0].mxu0 %v58
    %v126 = vpop.f32.mrb[0].mxu0
    %v127 = vadd.f32 %v54, %v126
    %v128 = vpop.f32.mrb[0].mxu0
    %129 = vdwg.mxu0
    %130 = vst [vmem:[#allocation7] sm:$0xff] %v127
    %131 = vmax.xlane.f32.xlu0 %v127
    %v132 = vpop.xlane.xlu0 %131
    %v133 = vsub.f32 %v127, %v132
    %v134 = vmul.f32 %v133, 1.442695
    %v135 = vpow.pop %v134
    %136 = vadd.xlane.f32.xlu0 %v135
    %v137 = vpop.xlane.xlu0 %136
    %v138 = vrcp.pop %v137
    %v139 = vmul.f32 %v135, %v138
    %140 = vst [vmem:[#allocation8] sm:$0xff] %v139
    // Predicated region
    $region22: #{tpu_custom_call.1} parent=1 // pred_check
      _
    $region23: #{tpu_custom_call.1} parent=1 // pred_check_branch
      %142 = sbr.rel (0) target = $region25
    $region24: #{tpu_custom_call.1} parent=1 // pred_region
      %s144 = ssub.s32 128, 128
      %145 = vsyncadd [#allocation4], %s144
      %s147 = sshll.u32 [#allocation7], 4
      %s148 = int_to_ptr.vmem [resolvable:$true] %s147
      %150 = dma.vmem_to_hbm [thread:$0]  %s148, 128, %s3, [#allocation4]
    $region25: #{tpu_custom_call.1} parent=1 // pred_fallthru
      _
    // Predicated region
    $region26: #{tpu_custom_call.1} parent=1 // pred_check
      _
    $region27: #{tpu_custom_call.1} parent=1 // pred_check_branch
      %152 = sbr.rel (0) target = $region29
    $region28: #{tpu_custom_call.1} parent=1 // pred_region
      %s154 = ssub.s32 128, 128
      %155 = vsyncadd [#allocation9], %s154
      %s157 = sshll.u32 [#allocation8], 4
      %s158 = int_to_ptr.vmem [resolvable:$true] %s157
      %160 = dma.vmem_to_hbm [thread:$0]  %s158, 128, %s4, [#allocation9]
    $region29: #{tpu_custom_call.1} parent=1 // pred_fallthru
      _
    // Predicated region
    $region30: #{tpu_custom_call.1} parent=1 // pred_check
      _
    $region31: #{tpu_custom_call.1} parent=1 // pred_check_branch
      %162 = sbr.rel (0) target = $region33
    $region32: #{tpu_custom_call.1} parent=1 // pred_region
      %163 = dma.done [#allocation4], 128
    $region33: #{tpu_custom_call.1} parent=1 // pred_fallthru
      _
    // Predicated region
    $region34: #{tpu_custom_call.1} parent=1 // pred_check
      _
    $region35: #{tpu_custom_call.1} parent=1 // pred_check_branch
      %165 = sbr.rel (0) target = $region37
    $region36: #{tpu_custom_call.1} parent=1 // pred_region
      %166 = dma.done [#allocation9], 128
    $region37: #{tpu_custom_call.1} parent=1 // pred_fallthru
      _
    %167 = vsyncpa [#allocation3], 1
    %168 = vsyncpa [#allocation6], 1
    %169 = vsyncpa [#allocation4], 1
    %170 = vsyncpa [#allocation9], 1

</llo_original>
